<compile_context>
chip_gen: v7x
topology: tpu7x:2x2x1
jax: 0.10.0
libtpu: 0.0.40
codegen_flags: <defaults>
</compile_context>

<pallas_src>
import functools

import jax
import jax.numpy as jnp
from jax.experimental import pallas as pl
from jax.experimental.pallas import tpu as pltpu


def _cheb_conv_kernel(*refs, K, compute_dtype, use_bias):
    # refs (use_bias=True):  lap (V,V), x (V,TB*Fin), w (K*TB*Fin,TB*Fout),
    #                        b (1,TB*Fout) f32, out (V,TB*Fout)
    # refs (use_bias=False): lap, x, w, out
    if use_bias:
        lap_ref, x_ref, w_ref, b_ref, o_ref = refs
    else:
        lap_ref, x_ref, w_ref, o_ref = refs
        b_ref = None

    cdt = compute_dtype
    lap = lap_ref[...].astype(cdt)          # no-op if lap is already cdt (e.g.
                                            # a persistently-bf16 Laplacian)
    x_in = x_ref[...]                       # (V, TB*Fin), input dtype
    x0f = x_in.astype(jnp.float32)          # f32 recurrence carry
    x0c = x_in.astype(cdt)                  # MXU operand / projection term

    # Chebyshev terms T_k(L) X.  Carries stay f32; each term is cast to the
    # compute dtype exactly once as it is produced (for the fused projection).
    terms = [x0c]
    if K > 1:
        x1f = jnp.dot(lap, x0c, preferred_element_type=jnp.float32)
        terms.append(x1f.astype(cdt))
        for _ in range(2, K):
            # T_k = L (2 T_{k-1}) - T_{k-2}; the exact x2 scales the small
            # (V, TB*Fin) activation instead of the (V, V) Laplacian.
            x2f = jnp.dot(lap, (2.0 * x1f).astype(cdt),
                          preferred_element_type=jnp.float32) - x0f
            terms.append(x2f.astype(cdt))
            x0f, x1f = x1f, x2f

    # Fused projection: one lane-dense matmul against the block-diagonal
    # (over the TB folded batches) weight.
    xk = terms[0] if K == 1 else jnp.concatenate(terms, axis=-1)  # (V, K*TB*Fin)
    acc = jnp.dot(xk, w_ref[...], preferred_element_type=jnp.float32)
    if use_bias:
        acc = acc + b_ref[...].astype(jnp.float32)
    o_ref[...] = acc.astype(o_ref.dtype)                          # (V, TB*Fout)


def _choose_batch_tile(B, Fin, Fout, K, itemsize):
    """Pick TB (batches folded per grid step).

    Prefer the largest *proper* divisor of B whose folded blocks are lane-dense
    (TB*Fin and TB*Fout multiples of 128 -> >= 2 grid steps, feeds both v7x
    TensorCores) while keeping the block-diagonal weight small.  Fall back to
    TB = B (full-dim blocks are always layout-legal; a single big step is the
    best choice on the 1-TC v5e/v6e anyway).
    """
    max_wexp_bytes = 2 * 1024 * 1024
    for tb in range(B - 1, 0, -1):
        if B % tb:
            continue
        if (tb * Fin) % 128 or (tb * Fout) % 128:
            continue
        if K * Fin * Fout * tb * tb * itemsize > max_wexp_bytes:
            continue
        return tb
    # TODO(synk): for very large B with no lane-dense divisor, the TB=B
    # fallback makes the block-diagonal weight O(B^2); split the batch outside
    # the kernel in that (pathological) case.
    return B


def cheb_conv_forward(lap_v, x, weight, bias=None, *,
                      compute_dtype=jnp.bfloat16):
    """ChebConv.forward.

    lap_v  : (V, V) dense per-graph Laplacian (pass it pre-cast to bf16 once at
             init to also halve its HBM read and VMEM footprint).
    x      : (B, V, Fin) input signals.
    weight : (Fin, K, Fout).
    bias   : (Fout,) or None.
    Returns (B, V, Fout) in x.dtype.
    """
    B, V, Fin = x.shape
    Fin_w, K, Fout = weight.shape
    assert Fin_w == Fin
    assert lap_v.shape == (V, V)

    cdt = jnp.dtype(compute_dtype)
    TB = _choose_batch_tile(B, Fin, Fout, K, cdt.itemsize)
    nsteps = B // TB

    # Fold the batch into the lane axis: x2[v, b*Fin + f] = x[b, v, f].
    # (One small XLA transpose pass in the wrapper; keeps the kernel's RHS and
    # stores lane-dense without any in-kernel relayout.)
    x2 = jnp.transpose(x, (1, 0, 2)).reshape(V, B * Fin)

    # Block-diagonal (over the TB batches of one grid step) weight:
    #   w_exp[k*TB*Fin + b*Fin + f, c*Fout + o] = weight[f, k, o] * (b == c)
    w_kfo = jnp.transpose(weight, (1, 0, 2))                   # (K, Fin, Fout)
    eye_tb = jnp.eye(TB, dtype=weight.dtype)
    w_exp = jnp.einsum('kfo,bc->kbfco', w_kfo, eye_tb)
    w_exp = w_exp.reshape(K * TB * Fin, TB * Fout).astype(cdt)

    use_bias = bias is not None

    in_arrays = [lap_v, x2, w_exp]
    in_specs = [
        # Constant index maps -> DMA'd once, resident in VMEM across steps.
        pl.BlockSpec((V, V), lambda i: (0, 0)),
        pl.BlockSpec((V, TB * Fin), lambda i: (0, i)),
        pl.BlockSpec((K * TB * Fin, TB * Fout), lambda i: (0, 0)),
        # TODO(synk): on v7x with very large V, pipeline_mode=pl.Buffered(1)
        # on the resident lap/weight would halve their VMEM footprint.
    ]
    if use_bias:
        b2d = jnp.tile(bias.astype(jnp.float32), TB).reshape(1, TB * Fout)
        in_arrays.append(b2d)
        in_specs.append(pl.BlockSpec((1, TB * Fout), lambda i: (0, 0)))

    # VMEM budget sized from the actual blocks (double-buffering + f32
    # temporaries), clamped to fit every generation's physical VMEM.
    lap_bytes = V * V * lap_v.dtype.itemsize
    x_blk_bytes = V * TB * Fin * x.dtype.itemsize
    w_bytes = K * TB * Fin * TB * Fout * cdt.itemsize
    o_blk_bytes = V * TB * Fout * x.dtype.itemsize
    b_bytes = TB * Fout * 4 if use_bias else 0
    blk_bytes = lap_bytes + x_blk_bytes + w_bytes + o_blk_bytes + b_bytes
    tmp_bytes = (K + 3) * V * TB * Fin * 4
    vmem_limit = int(min(max(6 * blk_bytes + tmp_bytes, 16 * 2 ** 20),
                         56 * 2 ** 20))

    flops = int(B * (K - 1) * 2 * V * V * Fin
                + nsteps * 2 * V * (K * TB * Fin) * (TB * Fout))
    bytes_accessed = int(lap_bytes                                # lap, once
                         + B * V * Fin * x.dtype.itemsize         # signals
                         + w_bytes + b_bytes                      # weights/bias
                         + V * B * Fout * x.dtype.itemsize)       # output

    out2 = pl.pallas_call(
        functools.partial(_cheb_conv_kernel, K=K, compute_dtype=cdt,
                          use_bias=use_bias),
        out_shape=jax.ShapeDtypeStruct((V, B * Fout), x.dtype),
        grid=(nsteps,),
        in_specs=in_specs,
        out_specs=pl.BlockSpec((V, TB * Fout), lambda i: (0, i)),
        compiler_params=pltpu.CompilerParams(
            # Folded-batch axis is embarrassingly parallel (megacore on v7x
            # when nsteps >= 2; single big step on 1-TC v5e/v6e).
            dimension_semantics=("parallel",),
            vmem_limit_bytes=vmem_limit,
        ),
        cost_estimate=pl.CostEstimate(flops=flops, transcendentals=0,
                                      bytes_accessed=bytes_accessed),
    )(*in_arrays)

    # Un-fold the batch: (V, B*Fout) -> (B, V, Fout).  Layout plumbing only.
    return jnp.transpose(out2.reshape(V, B, Fout), (1, 0, 2))


def _reference(lap_v, x, weight, bias):
    """Pure-JAX f32 reference mirroring cheb_conv_padded (+ bias) with the
    padded block-diagonal Laplacian kron(I_B, lap_v)."""
    B, V, Fin = x.shape
    _, K, Fout = weight.shape
    laplacian = jnp.kron(jnp.eye(B, dtype=lap_v.dtype), lap_v)   # (B*V, B*V)
    x0 = x.reshape(B * V, Fin)
    xs = [x0]
    if K > 1:
        x1 = laplacian @ x0
        xs.append(x1)
    for _ in range(2, K):
        x2 = 2.0 * (laplacian @ x1) - x0
        xs.append(x2)
        x0, x1 = x1, x2
    xk = jnp.stack(xs, axis=0)                                   # (K, B*V, Fin)
    xk = jnp.transpose(xk, (1, 2, 0)).reshape(B * V, Fin * K)    # flat f*K + k
    out = (xk @ weight.reshape(Fin * K, Fout)).reshape(B, V, Fout)
    if bias is not None:
        out = out + bias
    return out


if __name__ == "__main__":
    key = jax.random.PRNGKey(0)
    k_x, k_lap, k_w, k_b = jax.random.split(key, 4)

    # Small shapes consistent with the module.
    B, V, Fin, K, Fout = 2, 64, 16, 3, 32

    x = jax.random.normal(k_x, (B, V, Fin), dtype=jnp.float32)

    # Per-graph Laplacian (the padded Laplacian is kron(I_B, lap_v)).
    lap_v = jax.random.normal(k_lap, (V, V), dtype=jnp.float32) * 0.05
    lap_v = 0.5 * (lap_v + lap_v.T)    # symmetric, like a rescaled Laplacian

    weight = jax.random.normal(k_w, (Fin, K, Fout), dtype=jnp.float32) * 0.1
    bias = jax.random.normal(k_b, (Fout,), dtype=jnp.float32) * 0.1

    ref = _reference(lap_v, x, weight, bias)

    # bf16 MXU operands, f32 accumulation (default fast path).
    out = cheb_conv_forward(lap_v, x, weight, bias)
    out = jax.block_until_ready(out)
    assert out.shape == (B, V, Fout)
    assert jnp.allclose(out, ref, atol=5e-2, rtol=5e-2), \
        "bf16 kernel mismatch vs f32 reference"

    # f32 operands: exact-path check with tight tolerance.
    out_f32 = cheb_conv_forward(lap_v, x, weight, bias,
                                compute_dtype=jnp.float32)
    out_f32 = jax.block_until_ready(out_f32)
    assert jnp.allclose(out_f32, ref, atol=1e-4, rtol=1e-4), \
        "f32 kernel mismatch vs f32 reference"

    # No-bias specialization path.
    out_nb = jax.block_until_ready(cheb_conv_forward(lap_v, x, weight, None))
    ref_nb = _reference(lap_v, x, weight, None)
    assert jnp.allclose(out_nb, ref_nb, atol=5e-2, rtol=5e-2), \
        "no-bias kernel mismatch vs f32 reference"

    print("KERNEL_OK")
</pallas_src>

<mosaic_0001>
module attributes {stable_mosaic.version = 11 : i64} {
  func.func @_cheb_conv_kernel(%arg0: i32, %arg1: memref<64x64xf32, #tpu.memory_space<vmem>>, %arg2: memref<64x32xf32, #tpu.memory_space<vmem>>, %arg3: memref<96x64xbf16, #tpu.memory_space<vmem>>, %arg4: memref<1x64xf32, #tpu.memory_space<vmem>>, %arg5: memref<64x64xf32, #tpu.memory_space<vmem>>) attributes {dimension_semantics = [#tpu.dimension_semantics<parallel>], iteration_bounds = array<i64: 1>, scalar_prefetch = 0 : i64, scratch_operands = 0 : i64, tpu.core_type = #tpu.core_type<tc>, window_params = [{pipeline_mode = #tpu.pipeline_mode<synchronous>, transform_indices = @transform_0, window_bounds = array<i64: 64, 64>}, {transform_indices = @transform_1, window_bounds = array<i64: 64, 32>}, {pipeline_mode = #tpu.pipeline_mode<synchronous>, transform_indices = @transform_2, window_bounds = array<i64: 96, 64>}, {pipeline_mode = #tpu.pipeline_mode<synchronous>, transform_indices = @transform_3, window_bounds = array<i64: 1, 64>}, {transform_indices = @transform_4, window_bounds = array<i64: 64, 64>}]} {
    %c0 = arith.constant 0 : index
    %c0_0 = arith.constant 0 : index
    %0 = vector.load %arg1[%c0, %c0_0] : memref<64x64xf32, #tpu.memory_space<vmem>>, vector<64x64xf32>
    %1 = arith.truncf %0 : vector<64x64xf32> to vector<64x64xbf16>
    %c0_1 = arith.constant 0 : index
    %c0_2 = arith.constant 0 : index
    %2 = vector.load %arg2[%c0_1, %c0_2] : memref<64x32xf32, #tpu.memory_space<vmem>>, vector<64x32xf32>
    %3 = arith.truncf %2 : vector<64x32xf32> to vector<64x32xbf16>
    %cst = arith.constant dense<0.000000e+00> : vector<64x32xf32>
    %4 = tpu.matmul %1, %3, %cst {dimension_numbers = #tpu.dot_dimension_numbers<[1], [0], [0], [1], [0, 0, 1, 1], [], []>} : vector<64x64xbf16>, vector<64x32xbf16>, vector<64x32xf32> -> vector<64x32xf32>
    %5 = arith.truncf %4 : vector<64x32xf32> to vector<64x32xbf16>
    %cst_3 = arith.constant 2.000000e+00 : f32
    %6 = vector.broadcast %cst_3 : f32 to vector<64x32xf32>
    %7 = arith.mulf %6, %4 : vector<64x32xf32>
    %8 = arith.truncf %7 : vector<64x32xf32> to vector<64x32xbf16>
    %cst_4 = arith.constant dense<0.000000e+00> : vector<64x32xf32>
    %9 = tpu.matmul %1, %8, %cst_4 {dimension_numbers = #tpu.dot_dimension_numbers<[1], [0], [0], [1], [0, 0, 1, 1], [], []>} : vector<64x64xbf16>, vector<64x32xbf16>, vector<64x32xf32> -> vector<64x32xf32>
    %10 = arith.subf %9, %2 : vector<64x32xf32>
    %11 = arith.truncf %10 : vector<64x32xf32> to vector<64x32xbf16>
    %12 = tpu.concatenate %3, %5, %11 in 1 : vector<64x32xbf16>, vector<64x32xbf16>, vector<64x32xbf16> -> vector<64x96xbf16>
    %c0_5 = arith.constant 0 : index
    %c0_6 = arith.constant 0 : index
    %13 = vector.load %arg3[%c0_5, %c0_6] : memref<96x64xbf16, #tpu.memory_space<vmem>>, vector<96x64xbf16>
    %cst_7 = arith.constant dense<0.000000e+00> : vector<64x64xf32>
    %14 = tpu.matmul %12, %13, %cst_7 {dimension_numbers = #tpu.dot_dimension_numbers<[1], [0], [0], [1], [0, 0, 1, 1], [], []>} : vector<64x96xbf16>, vector<96x64xbf16>, vector<64x64xf32> -> vector<64x64xf32>
    %c0_8 = arith.constant 0 : index
    %c0_9 = arith.constant 0 : index
    %15 = vector.load %arg4[%c0_8, %c0_9] : memref<1x64xf32, #tpu.memory_space<vmem>>, vector<1x64xf32>
    %16 = vector.broadcast %15 : vector<1x64xf32> to vector<64x64xf32>
    %17 = arith.addf %14, %16 : vector<64x64xf32>
    %c0_10 = arith.constant 0 : index
    %c0_11 = arith.constant 0 : index
    %18 = vector.load %arg5[%c0_10, %c0_11] : memref<64x64xf32, #tpu.memory_space<vmem>>, vector<64x64xf32>
    tpu.vector_store %arg5[%c0_10, %c0_11], %17 {strides = array<i32>} : memref<64x64xf32, #tpu.memory_space<vmem>>, vector<64x64xf32>,
    return
  }
  func.func @transform_0(%arg0: i32) -> (i32, i32) {
    %c0_i32 = arith.constant 0 : i32
    %c0_i32_0 = arith.constant 0 : i32
    %c0_i32_1 = arith.constant 0 : i32
    return %c0_i32, %c0_i32_0 : i32, i32
  }
  func.func @transform_1(%arg0: i32) -> (i32, i32) {
    %c0_i32 = arith.constant 0 : i32
    %c0_i32_0 = arith.constant 0 : i32
    return %c0_i32, %arg0 : i32, i32
  }
  func.func @transform_2(%arg0: i32) -> (i32, i32) {
    %c0_i32 = arith.constant 0 : i32
    %c0_i32_0 = arith.constant 0 : i32
    %c0_i32_1 = arith.constant 0 : i32
    return %c0_i32, %c0_i32_0 : i32, i32
  }
  func.func @transform_3(%arg0: i32) -> (i32, i32) {
    %c0_i32 = arith.constant 0 : i32
    %c0_i32_0 = arith.constant 0 : i32
    %c0_i32_1 = arith.constant 0 : i32
    return %c0_i32, %c0_i32_0 : i32, i32
  }
  func.func @transform_4(%arg0: i32) -> (i32, i32) {
    %c0_i32 = arith.constant 0 : i32
    %c0_i32_0 = arith.constant 0 : i32
    return %c0_i32, %arg0 : i32, i32
  }
}

</mosaic_0001>

<llo_original>
// kernel: tpu_custom_call.1
$region0: #{tpu_custom_call.1}
  #allocation0 [shape = 'u32[]', space=smem, size = 0x4, offset = 0x4, fixed_abs, tag = 'smem constant byte address 0x4 - core index']
  #allocation1 [shape = 'u32[144,128]{1,0:T(1,128)}', space=vmem, size = 0x12000, scoped, tag = 'internal scratch']
  %s0 = inlined_call_operand.vmem [shape: f32[64,64], index: 0, kind: input, shape index: {}]
  %s1 = inlined_call_operand.vmem [shape: f32[64,32], index: 1, kind: input, shape index: {}]
  %s2 = inlined_call_operand.vmem [shape: bf16[96,64], index: 2, kind: input, shape index: {}]
  %s3 = inlined_call_operand.vmem [shape: f32[1,64], index: 3, kind: input, shape index: {}]
  %s4 = inlined_call_operand.hbm [shape: f32[64,64], index: 4, kind: output, shape index: {}]
  %s5 = sld [smem:[#allocation0]]
  $region26: #{tpu_custom_call.1} parent=0
    _
  %s7 = ssub.s32 1, %s5
  %s8 = scalar_select 0, %s7, %s5
  $region1: #{tpu_custom_call.1} parent=0
    #allocation2 [shape = 'u8[32768]{0}', space=vmem, size = 0x8000, scoped, tag = 'output window, operand 0, single buffered']
    #allocation3 [shape = 's32[1]{0}', space=sflag, size = 0x4, scoped, tag = 'scoped memory for tpu_custom_call.1']
    %9 = vsyncpa [#allocation3], 0
    // Predicated region
    $region2: #{tpu_custom_call.1} parent=1 // pred_check
      _
    $region3: #{tpu_custom_call.1} parent=1 // pred_check_branch
      %11 = sbr.rel (0) target = $region5
    $region4: #{tpu_custom_call.1} parent=1 // pred_region
      _
    $region5: #{tpu_custom_call.1} parent=1 // pred_fallthru
      _
    // Predicated region
    $region6: #{tpu_custom_call.1} parent=1 // pred_check
      _
    $region7: #{tpu_custom_call.1} parent=1 // pred_check_branch
      %13 = sbr.rel (0) target = $region9
    $region8: #{tpu_custom_call.1} parent=1 // pred_region
      _
    $region9: #{tpu_custom_call.1} parent=1 // pred_fallthru
      _
    // Predicated region
    $region10: #{tpu_custom_call.1} parent=1 // pred_check
      _
    $region11: #{tpu_custom_call.1} parent=1 // pred_check_branch
      %15 = sbr.rel (0) target = $region13
    $region12: #{tpu_custom_call.1} parent=1 // pred_region
      _
    $region13: #{tpu_custom_call.1} parent=1 // pred_fallthru
      _
    // Predicated region
    $region14: #{tpu_custom_call.1} parent=1 // pred_check
      _
    $region15: #{tpu_custom_call.1} parent=1 // pred_check_branch
      %17 = sbr.rel (0) target = $region17
    $region16: #{tpu_custom_call.1} parent=1 // pred_region
      _
    $region17: #{tpu_custom_call.1} parent=1 // pred_fallthru
      _
    %v19 = vld [vmem:[%s0] sm:$0xff]
    %v20 = vld [vmem:[%s0 + $0x8] sm:$0xff]
    %v21 = vld [vmem:[%s0 + $0x10] sm:$0xff]
    %v22 = vld [vmem:[%s0 + $0x18] sm:$0xff]
    %v23 = vld [vmem:[%s0 + $0x20] sm:$0xff]
    %v24 = vld [vmem:[%s0 + $0x28] sm:$0xff]
    %v25 = vld [vmem:[%s0 + $0x30] sm:$0xff]
    %v26 = vld [vmem:[%s0 + $0x38] sm:$0xff]
    %v27 = vpack.c.bf16 %v20, %v19
    %v28 = vpack.c.bf16 %v22, %v21
    %v29 = vpack.c.bf16 %v24, %v23
    %v30 = vpack.c.bf16 %v26, %v25
    %v31 = vld [vmem:[%s1] sm:$0xff]
    %v32 = vld [vmem:[%s1 + $0x8] sm:$0xff]
    %v33 = vld [vmem:[%s1 + $0x10] sm:$0xff]
    %v34 = vld [vmem:[%s1 + $0x18] sm:$0xff]
    %v35 = vld [vmem:[%s1 + $0x20] sm:$0xff]
    %v36 = vld [vmem:[%s1 + $0x28] sm:$0xff]
    %v37 = vld [vmem:[%s1 + $0x30] sm:$0xff]
    %v38 = vld [vmem:[%s1 + $0x38] sm:$0xff]
    %v39 = vpack.c.bf16 %v32, %v31
    %v40 = vpack.c.bf16 %v34, %v33
    %v41 = vpack.c.bf16 %v36, %v35
    %v42 = vpack.c.bf16 %v38, %v37
    %vm43 = vcmask 523264
    %v45 = vsel %vm43, %v27, 0
    %v48 = vsel %vm43, %v28, 0
    %v51 = vsel %vm43, %v29, 0
    %v54 = vsel %vm43, %v30, 0
    %56 = vmatprep.subr.bf16.mxu0 0
    %57 = vmatpush1.bf16.msra.mxu0 %v39
    %58 = vmatprep.subr.bf16.mxu0 0
    %59 = vmatpush1.bf16.msra.mxu0 %v40
    %60 = vmatprep.subr.bf16.mxu0 0
    %61 = vmatpush1.bf16.msra.mxu0 %v41
    %62 = vmatprep.subr.bf16.mxu0 0
    %63 = vmatpush1.bf16.msra.mxu0 %v42
    %64 = vmatprep.subr.bf16.mxu0 0
    %65 = vmatpush1.bf16.msra.mxu0 0
    %66 = vmatprep.subr.bf16.mxu0 0
    %67 = vmatpush1.bf16.msra.mxu0 0
    %68 = vmatprep.subr.bf16.mxu0 0
    %69 = vmatpush1.bf16.msra.mxu0 0
    %70 = vmatprep.subr.bf16.mxu0 0
    %71 = vmatpush1.bf16.msra.mxu0 0
    %72 = vmatprep.subr.bf16.mxu0 0
    %73 = vmatpush1.bf16.msra.mxu0 0
    %74 = vmatprep.subr.bf16.mxu0 0
    %75 = vmatpush1.bf16.msra.mxu0 0
    %76 = vmatprep.subr.bf16.mxu0 0
    %77 = vmatpush1.bf16.msra.mxu0 0
    %78 = vmatprep.subr.bf16.mxu0 0
    %79 = vmatpush1.bf16.msra.mxu0 0
    %80 = vmatprep.subr.bf16.mxu0 0
    %81 = vmatpush1.bf16.msra.mxu0 0
    %82 = vmatprep.subr.bf16.mxu0 0
    %83 = vmatpush1.bf16.msra.mxu0 0
    %84 = vmatprep.subr.bf16.mxu0 0
    %85 = vmatpush1.bf16.msra.mxu0 0
    %86 = vmatprep.subr.bf16.mxu0 0
    %87 = vmatpush1.bf16.msra.mxu0 0
    %88 = vmatprep.mubr.bf16.mxu0 0
    %89 = vmatmul.mubr.bf16.gmra.mrb[0].mxu0 %v45
    %v90 = vpop.f32.mrb[0].mxu0
    %v91 = vadd.f32 0.0, %v90
    %v92 = vpop.f32.mrb[0].mxu0
    %v93 = vpop.f32.mrb[0].mxu0
    %v94 = vadd.f32 0.0, %v93
    %v95 = vpop.f32.mrb[0].mxu0
    %96 = vmatprep.mubr.bf16.mxu0 0
    %97 = vmatmul.mubr.bf16.gmra.mrb[0].mxu0 %v48
    %v98 = vpop.f32.mrb[0].mxu0
    %v99 = vadd.f32 0.0, %v98
    %v100 = vpop.f32.mrb[0].mxu0
    %v101 = vpop.f32.mrb[0].mxu0
    %v102 = vadd.f32 0.0, %v101
    %v103 = vpop.f32.mrb[0].mxu0
    %104 = vmatprep.mubr.bf16.mxu0 0
    %105 = vmatmul.mubr.bf16.gmra.mrb[0].mxu0 %v51
    %v106 = vpop.f32.mrb[0].mxu0
    %v107 = vadd.f32 0.0, %v106
    %v108 = vpop.f32.mrb[0].mxu0
    %v109 = vpop.f32.mrb[0].mxu0
    %v110 = vadd.f32 0.0, %v109
    %v111 = vpop.f32.mrb[0].mxu0
    %112 = vmatprep.mubr.bf16.mxu0 0
    %113 = vmatmul.mubr.bf16.gmra.mrb[0].mxu0 %v54
    %v114 = vpop.f32.mrb[0].mxu0
    %v115 = vadd.f32 0.0, %v114
    %v116 = vpop.f32.mrb[0].mxu0
    %v117 = vpop.f32.mrb[0].mxu0
    %v118 = vadd.f32 0.0, %v117
    %v119 = vpop.f32.mrb[0].mxu0
    %120 = vdwg.mxu0
    %v121 = vpack.c.bf16 %v94, %v91
    %v122 = vpack.c.bf16 %v102, %v99
    %v123 = vpack.c.bf16 %v110, %v107
    %v124 = vpack.c.bf16 %v118, %v115
    %v125 = vmul.f32 %v91, 2.0
    %v126 = vmul.f32 %v94, 2.0
    %v127 = vmul.f32 %v99, 2.0
    %v128 = vmul.f32 %v102, 2.0
    %v129 = vmul.f32 %v107, 2.0
    %v130 = vmul.f32 %v110, 2.0
    %v131 = vmul.f32 %v115, 2.0
    %v132 = vmul.f32 %v118, 2.0
    %v133 = vpack.c.bf16 %v126, %v125
    %v134 = vpack.c.bf16 %v128, %v127
    %v135 = vpack.c.bf16 %v130, %v129
    %v136 = vpack.c.bf16 %v132, %v131
    %137 = vmatprep.subr.bf16.mxu0 0
    %138 = vmatpush1.bf16.msra.mxu0 %v133
    %139 = vmatprep.subr.bf16.mxu0 0
    %140 = vmatpush1.bf16.msra.mxu0 %v134
    %141 = vmatprep.subr.bf16.mxu0 0
    %142 = vmatpush1.bf16.msra.mxu0 %v135
    %143 = vmatprep.subr.bf16.mxu0 0
    %144 = vmatpush1.bf16.msra.mxu0 %v136
    %145 = vmatprep.subr.bf16.mxu0 0
    %146 = vmatpush1.bf16.msra.mxu0 0
    %147 = vmatprep.subr.bf16.mxu0 0
    %148 = vmatpush1.bf16.msra.mxu0 0
    %149 = vmatprep.subr.bf16.mxu0 0
    %150 = vmatpush1.bf16.msra.mxu0 0
    %151 = vmatprep.subr.bf16.mxu0 0
    %152 = vmatpush1.bf16.msra.mxu0 0
    %153 = vmatprep.subr.bf16.mxu0 0
    %154 = vmatpush1.bf16.msra.mxu0 0
    %155 = vmatprep.subr.bf16.mxu0 0
    %156 = vmatpush1.bf16.msra.mxu0 0
    %157 = vmatprep.subr.bf16.mxu0 0
    %158 = vmatpush1.bf16.msra.mxu0 0
    %159 = vmatprep.subr.bf16.mxu0 0
    %160 = vmatpush1.bf16.msra.mxu0 0
    %161 = vmatprep.subr.bf16.mxu0 0
    %162 = vmatpush1.bf16.msra.mxu0 0
    %163 = vmatprep.subr.bf16.mxu0 0
    %164 = vmatpush1.bf16.msra.mxu0 0
    %165 = vmatprep.subr.bf16.mxu0 0
    %166 = vmatpush1.bf16.msra.mxu0 0
    %167 = vmatprep.subr.bf16.mxu0 0
    %168 = vmatpush1.bf16.msra.mxu0 0
    %169 = vmatprep.mubr.bf16.mxu0 0
    %170 = vmatmul.mubr.bf16.gmra.mrb[0].mxu0 %v45
    %v171 = vpop.f32.mrb[0].mxu0
    %v172 = vadd.f32 0.0, %v171
    %v173 = vpop.f32.mrb[0].mxu0
    %v174 = vpop.f32.mrb[0].mxu0
    %v175 = vadd.f32 0.0, %v174
    %v176 = vpop.f32.mrb[0].mxu0
    %177 = vmatprep.mubr.bf16.mxu0 0
    %178 = vmatmul.mubr.bf16.gmra.mrb[0].mxu0 %v48
    %v179 = vpop.f32.mrb[0].mxu0
    %v180 = vadd.f32 0.0, %v179
    %v181 = vpop.f32.mrb[0].mxu0
    %v182 = vpop.f32.mrb[0].mxu0
    %v183 = vadd.f32 0.0, %v182
    %v184 = vpop.f32.mrb[0].mxu0
    %185 = vmatprep.mubr.bf16.mxu0 0
    %186 = vmatmul.mubr.bf16.gmra.mrb[0].mxu0 %v51
    %v187 = vpop.f32.mrb[0].mxu0
    %v188 = vadd.f32 0.0, %v187
    %v189 = vpop.f32.mrb[0].mxu0
    %v190 = vpop.f32.mrb[0].mxu0
    %v191 = vadd.f32 0.0, %v190
    %v192 = vpop.f32.mrb[0].mxu0
    %193 = vmatprep.mubr.bf16.mxu0 0
    %194 = vmatmul.mubr.bf16.gmra.mrb[0].mxu0 %v54
    %v195 = vpop.f32.mrb[0].mxu0
    %v196 = vadd.f32 0.0, %v195
    %v197 = vpop.f32.mrb[0].mxu0
    %v198 = vpop.f32.mrb[0].mxu0
    %v199 = vadd.f32 0.0, %v198
    %v200 = vpop.f32.mrb[0].mxu0
    %201 = vdwg.mxu0
    %v202 = vsub.f32 %v172, %v31
    %v203 = vsub.f32 %v175, %v32
    %v204 = vsub.f32 %v180, %v33
    %v205 = vsub.f32 %v183, %v34
    %v206 = vsub.f32 %v188, %v35
    %v207 = vsub.f32 %v191, %v36
    %v208 = vsub.f32 %v196, %v37
    %v209 = vsub.f32 %v199, %v38
    %v210 = vpack.c.bf16 %v203, %v202
    %v211 = vpack.c.bf16 %v205, %v204
    %v212 = vpack.c.bf16 %v207, %v206
    %v213 = vpack.c.bf16 %v209, %v208
    %218 = vrot.lane.b32.xlu0 %v121, 32
    %v219 = vpop.permute.xlu0 %218
    %220 = vrot.lane.b32.xlu0 %v122, 32
    %v221 = vpop.permute.xlu0 %220
    %222 = vrot.lane.b32.xlu0 %v123, 32
    %v223 = vpop.permute.xlu0 %222
    %224 = vrot.lane.b32.xlu0 %v124, 32
    %v225 = vpop.permute.xlu0 %224
    %230 = vrot.lane.b32.xlu0 %v210, 64
    %v231 = vpop.permute.xlu0 %230
    %232 = vrot.lane.b32.xlu0 %v211, 64
    %v233 = vpop.permute.xlu0 %232
    %234 = vrot.lane.b32.xlu0 %v212, 64
    %v235 = vpop.permute.xlu0 %234
    %236 = vrot.lane.b32.xlu0 %v213, 64
    %v237 = vpop.permute.xlu0 %236
    %vm238 = vcmask 261120
    %v241 = vsel %vm238, %v39, %v219
    %v244 = vsel %vm238, %v40, %v221
    %v247 = vsel %vm238, %v41, %v223
    %v250 = vsel %vm238, %v42, %v225
    %v252 = vsel %vm43, %v241, %v231
    %v254 = vsel %vm43, %v244, %v233
    %v256 = vsel %vm43, %v247, %v235
    %v258 = vsel %vm43, %v250, %v237
    %v259 = vld [vmem:[%s2] sm:$0xf]
    %v260 = vld [vmem:[%s2 + $0x4] sm:$0xf]
    %v261 = vld [vmem:[%s2 + $0x8] sm:$0xf]
    %v262 = vld [vmem:[%s2 + $0xc] sm:$0xf]
    %v263 = vld [vmem:[%s2 + $0x10] sm:$0xf]
    %v264 = vld [vmem:[%s2 + $0x14] sm:$0xf]
    %v265 = vld [vmem:[%s2 + $0x18] sm:$0xf]
    %v266 = vld [vmem:[%s2 + $0x1c] sm:$0xf]
    %v267 = vld [vmem:[%s2 + $0x20] sm:$0xf]
    %v268 = vld [vmem:[%s2 + $0x24] sm:$0xf]
    %v269 = vld [vmem:[%s2 + $0x28] sm:$0xf]
    %v270 = vld [vmem:[%s2 + $0x2c] sm:$0xf]
    %v271 = vld [vmem:[%s3] sm:$0x1]
    %v273 = vlaneseq
    %v274 = vshrl.u32 %v273, 7
    %v275 = vsub.s32 0, %v274
    %v276 = vrot.slane %v271, %v275
    %v290 = vunpack.c.l.b16 %v259
    %v291 = vunpack.c.l.b16 %v260
    %v292 = vunpack.c.l.b16 %v261
    %v293 = vunpack.c.l.b16 %v262
    %v294 = vunpack.c.l.b16 %v263
    %v295 = vunpack.c.l.b16 %v264
    %v296 = vunpack.c.l.b16 %v265
    %v297 = vunpack.c.l.b16 %v266
    %v298 = vunpack.c.l.b16 %v267
    %v299 = vunpack.c.l.b16 %v268
    %v300 = vunpack.c.l.b16 %v269
    %v301 = vunpack.c.l.b16 %v270
    %v302 = vpack.c.b16 %v291, %v290
    %v303 = vpack.c.b16 %v293, %v292
    %v304 = vpack.c.b16 %v295, %v294
    %v305 = vpack.c.b16 %v297, %v296
    %v306 = vpack.c.b16 %v299, %v298
    %v307 = vpack.c.b16 %v301, %v300
    %vm314 = vcmask 785408
    %v315 = vsel %vm314, %v252, 0
    %v317 = vsel %vm314, %v254, 0
    %v319 = vsel %vm314, %v256, 0
    %v321 = vsel %vm314, %v258, 0
    %323 = vmatprep.subr.bf16.mxu0 0
    %324 = vmatpush1.bf16.msra.mxu0 %v302
    %325 = vmatprep.subr.bf16.mxu0 0
    %326 = vmatpush1.bf16.msra.mxu0 %v303
    %327 = vmatprep.subr.bf16.mxu0 0
    %328 = vmatpush1.bf16.msra.mxu0 %v304
    %329 = vmatprep.subr.bf16.mxu0 0
    %330 = vmatpush1.bf16.msra.mxu0 %v305
    %331 = vmatprep.subr.bf16.mxu0 0
    %332 = vmatpush1.bf16.msra.mxu0 %v306
    %333 = vmatprep.subr.bf16.mxu0 0
    %334 = vmatpush1.bf16.msra.mxu0 %v307
    %335 = vmatprep.subr.bf16.mxu0 0
    %336 = vmatpush1.bf16.msra.mxu0 0
    %337 = vmatprep.subr.bf16.mxu0 0
    %338 = vmatpush1.bf16.msra.mxu0 0
    %339 = vmatprep.subr.bf16.mxu0 0
    %340 = vmatpush1.bf16.msra.mxu0 0
    %341 = vmatprep.subr.bf16.mxu0 0
    %342 = vmatpush1.bf16.msra.mxu0 0
    %343 = vmatprep.subr.bf16.mxu0 0
    %344 = vmatpush1.bf16.msra.mxu0 0
    %345 = vmatprep.subr.bf16.mxu0 0
    %346 = vmatpush1.bf16.msra.mxu0 0
    %347 = vmatprep.subr.bf16.mxu0 0
    %348 = vmatpush1.bf16.msra.mxu0 0
    %349 = vmatprep.subr.bf16.mxu0 0
    %350 = vmatpush1.bf16.msra.mxu0 0
    %351 = vmatprep.subr.bf16.mxu0 0
    %352 = vmatpush1.bf16.msra.mxu0 0
    %353 = vmatprep.subr.bf16.mxu0 0
    %354 = vmatpush1.bf16.msra.mxu0 0
    %355 = vmatprep.mubr.bf16.mxu0 0
    %356 = vmatmul.mubr.bf16.gmra.mrb[0].mxu0 %v315
    %v357 = vpop.f32.mrb[0].mxu0
    %v358 = vadd.f32 %v276, %v357
    %v359 = vpop.f32.mrb[0].mxu0
    %v360 = vpop.f32.mrb[0].mxu0
    %v361 = vadd.f32 %v276, %v360
    %v362 = vpop.f32.mrb[0].mxu0
    %363 = vmatprep.mubr.bf16.mxu0 0
    %364 = vmatmul.mubr.bf16.gmra.mrb[0].mxu0 %v317
    %v365 = vpop.f32.mrb[0].mxu0
    %v366 = vadd.f32 %v276, %v365
    %v367 = vpop.f32.mrb[0].mxu0
    %v368 = vpop.f32.mrb[0].mxu0
    %v369 = vadd.f32 %v276, %v368
    %v370 = vpop.f32.mrb[0].mxu0
    %371 = vmatprep.mubr.bf16.mxu0 0
    %372 = vmatmul.mubr.bf16.gmra.mrb[0].mxu0 %v319
    %v373 = vpop.f32.mrb[0].mxu0
    %v374 = vadd.f32 %v276, %v373
    %v375 = vpop.f32.mrb[0].mxu0
    %v376 = vpop.f32.mrb[0].mxu0
    %v377 = vadd.f32 %v276, %v376
    %v378 = vpop.f32.mrb[0].mxu0
    %379 = vmatprep.mubr.bf16.mxu0 0
    %380 = vmatmul.mubr.bf16.gmra.mrb[0].mxu0 %v321
    %v381 = vpop.f32.mrb[0].mxu0
    %v382 = vadd.f32 %v276, %v381
    %v383 = vpop.f32.mrb[0].mxu0
    %v384 = vpop.f32.mrb[0].mxu0
    %v385 = vadd.f32 %v276, %v384
    %v386 = vpop.f32.mrb[0].mxu0
    %387 = vdwg.mxu0
    %388 = vst.msk [vmem:[#allocation2] sm:$0xff] %vm43, %v358
    %389 = vst.msk [vmem:[#allocation2 + $0x8] sm:$0xff] %vm43, %v361
    %390 = vst.msk [vmem:[#allocation2 + $0x10] sm:$0xff] %vm43, %v366
    %391 = vst.msk [vmem:[#allocation2 + $0x18] sm:$0xff] %vm43, %v369
    %392 = vst.msk [vmem:[#allocation2 + $0x20] sm:$0xff] %vm43, %v374
    %393 = vst.msk [vmem:[#allocation2 + $0x28] sm:$0xff] %vm43, %v377
    %394 = vst.msk [vmem:[#allocation2 + $0x30] sm:$0xff] %vm43, %v382
    %395 = vst.msk [vmem:[#allocation2 + $0x38] sm:$0xff] %vm43, %v385
    // Predicated region
    $region18: #{tpu_custom_call.1} parent=1 // pred_check
      _
    $region19: #{tpu_custom_call.1} parent=1 // pred_check_branch
      %397 = sbr.rel (0) target = $region21
    $region20: #{tpu_custom_call.1} parent=1 // pred_region
      %s399 = ssub.s32 1024, 1024
      %400 = vsyncadd [#allocation3], %s399
      %s401 = sshll.u32 [#allocation2], 4
      %s402 = int_to_ptr.vmem [resolvable:$true] %s401
      %407 = dma.vmem_to_hbm [thread:$0]  %s402, 1024, %s4, [#allocation3], 128, 128, 8
    $region21: #{tpu_custom_call.1} parent=1 // pred_fallthru
      _
    // Predicated region
    $region22: #{tpu_custom_call.1} parent=1 // pred_check
      _
    $region23: #{tpu_custom_call.1} parent=1 // pred_check_branch
      %409 = sbr.rel (0) target = $region25
    $region24: #{tpu_custom_call.1} parent=1 // pred_region
      %410 = dma.done [#allocation3], 1024
    $region25: #{tpu_custom_call.1} parent=1 // pred_fallthru
      _
    %411 = vsyncpa [#allocation3], 1

</llo_original>
